<compile_context>
chip_gen: v7x
topology: tpu7x:2x2x1
jax: 0.10.0
libtpu: 0.0.40
codegen_flags: <defaults>
</compile_context>

<pallas_src>
import math
import jax
import jax.numpy as jnp
from jax.experimental import pallas as pl
from jax.experimental.pallas import tpu as pltpu

LN_EPS = 1e-5  # PyTorch nn.LayerNorm default


def _round_up(x, m):
    return ((x + m - 1) // m) * m


def _pad_embed(e):
    # Lane-dense padding; prefer 256-alignment (fills a v6e/v7x 256-wide MXU
    # pass) when the extra zero-padding is small, else 128.
    p128, p256 = _round_up(e, 128), _round_up(e, 256)
    return p256 if (p256 - e) * 4 <= e else p128


def _vmem_limit_bytes():
    # ~100 MiB on 128 MiB parts (v5e/v6e), ~51 MiB on 64 MiB parts (v7x).
    try:
        cap = pltpu.get_tpu_info().vmem_capacity_bytes
    except Exception:
        cap = 64 * 1024 * 1024
    return min(int(cap * 4 // 5), 100 * 1024 * 1024)


def _ln(x, g, b, inv_n):
    # Padding-aware LayerNorm: padded features are zero in x, g, b, so
    # E[x] and E[x^2] computed with the *real* feature count are exact.
    mu = jnp.sum(x, axis=-1, keepdims=True) * inv_n
    ms = jnp.sum(x * x, axis=-1, keepdims=True) * inv_n
    var = ms - mu * mu
    return (x - mu) * jax.lax.rsqrt(var + LN_EPS) * g + b


# --------------------------------------------------------------------------
# Kernel 1: transformer blocks looped over grid=(L,); residual lives in the
# output ref (constant block index -> resident accumulator across layers).
# --------------------------------------------------------------------------
def make_block_kernel(B, Tp, Ep, e_real):
    inv_e = 1.0 / float(e_real)
    N = B * Tp

    def kernel(x_emb_ref, wall_ref, vec_ref, x_ref):
        l = pl.program_id(0)

        @pl.when(l == 0)
        def _():
            x_ref[...] = x_emb_ref[...]

        vec = vec_ref[0]                                  # (9, Ep) f32
        ln1g, ln1b = vec[0:1], vec[1:2]
        bq, bk, bv = vec[2:3], vec[3:4], vec[4:5]
        bo = vec[5:6]
        ln2g, ln2b = vec[6:7], vec[7:8]
        b1 = vec[8:9]

        x = x_ref[...]                                    # (N, Ep) f32 residual

        # ---- attention sublayer: x = x + Wo @ softmax(q k^T + mask) v ----
        h = _ln(x, ln1g, ln1b, inv_e).astype(jnp.bfloat16)
        qkv = jnp.dot(h, wall_ref[0, :, 0:3 * Ep],        # fused QKV matmul
                      preferred_element_type=jnp.float32)  # (N, 3Ep) f32
        q = (qkv[:, 0:Ep] + bq).reshape(B, Tp, Ep).astype(jnp.bfloat16)
        k = (qkv[:, Ep:2 * Ep] + bk).reshape(B, Tp, Ep).astype(jnp.bfloat16)
        v = (qkv[:, 2 * Ep:3 * Ep] + bv).reshape(B, Tp, Ep).astype(jnp.bfloat16)

        # Per-batch scores: (B, Tp, Tp) -- no cross-batch FLOPs, no (N, N) arrays.
        s = jnp.einsum('bqd,bkd->bqk', q, k,
                       preferred_element_type=jnp.float32)
        # Causal mask built in-kernel (no resident mask input).
        row = jax.lax.broadcasted_iota(jnp.int32, (Tp, Tp), 0)
        col = jax.lax.broadcasted_iota(jnp.int32, (Tp, Tp), 1)
        s = jnp.where((col <= row)[None, :, :], s, -1e9)
        s = s - jnp.max(s, axis=-1, keepdims=True)
        p = jnp.exp(s)
        p = p * pl.reciprocal(jnp.sum(p, axis=-1, keepdims=True), approx=True)

        attn = jnp.einsum('bqk,bkd->bqd', p.astype(jnp.bfloat16), v,
                          preferred_element_type=jnp.float32)
        attn = attn.reshape(N, Ep).astype(jnp.bfloat16)
        attn = jnp.dot(attn, wall_ref[0, :, 3 * Ep:4 * Ep],
                       preferred_element_type=jnp.float32) + bo
        x = x + attn

        # ---- "feed-forward" sublayer: x = x + Linear1(LN2(x)) ----
        h2 = _ln(x, ln2g, ln2b, inv_e).astype(jnp.bfloat16)
        x = x + jnp.dot(h2, wall_ref[0, :, 4 * Ep:5 * Ep],
                        preferred_element_type=jnp.float32) + b1

        x_ref[...] = x

    return kernel


# --------------------------------------------------------------------------
# Kernel 2: final LayerNorm + vocab projection, tiled over (rows, vocab cols)
# --------------------------------------------------------------------------
def make_head_kernel(e_real):
    inv_e = 1.0 / float(e_real)

    def kernel(x_ref, lnf_ref, wout_ref, out_ref):
        g, b = lnf_ref[0:1, :], lnf_ref[1:2, :]
        hf = _ln(x_ref[...], g, b, inv_e).astype(jnp.bfloat16)
        out_ref[...] = jnp.dot(hf, wout_ref[...],
                               preferred_element_type=jnp.float32)

    return kernel


# --------------------------------------------------------------------------
# Wrapper: plain-JAX glue (embedding gather, padding, weight packing)
# --------------------------------------------------------------------------
def character_gpt_forward(tokens, params):
    E = params['wq'].shape[-1]
    V = params['wout'].shape[-1]
    L = params['wq'].shape[0]
    B, T = tokens.shape

    Ep = _pad_embed(E)
    Vp = _round_up(V, 128)
    Tp = _round_up(T, 8)
    N = B * Tp

    # --- embedding gather + pad + flatten (plain-JAX glue) ---
    emb = params['embed'][tokens].astype(jnp.float32)            # (B, T, E)
    x0 = jnp.zeros((B, Tp, Ep), jnp.float32).at[:, :T, :E].set(emb)
    x0 = x0.reshape(N, Ep)

    scale = 1.0 / math.sqrt(E)                                   # folded into Wq/bq

    def padw(w):   # (L, E, E) -> (L, Ep, Ep) f32
        return jnp.zeros((L, Ep, Ep), jnp.float32).at[:, :E, :E].set(w)

    def padv(v):   # (L, 1, E) -> (L, 1, Ep) f32
        return jnp.zeros((L, 1, Ep), jnp.float32).at[:, :, :E].set(v)

    # One bf16 weight slab per layer: [Wq*scale | Wk | Wv | Wo | W1]
    wall = jnp.concatenate(
        [padw(params['wq'] * scale), padw(params['wk']), padw(params['wv']),
         padw(params['wo']), padw(params['w1'])],
        axis=-1).astype(jnp.bfloat16)                            # (L, Ep, 5Ep)

    # One f32 vector slab per layer: ln1g ln1b bq*scale bk bv bo ln2g ln2b b1
    vec = jnp.concatenate(
        [padv(params['ln1g']), padv(params['ln1b']),
         padv(params['bq'] * scale), padv(params['bk']), padv(params['bv']),
         padv(params['bo']),
         padv(params['ln2g']), padv(params['ln2b']), padv(params['b1'])],
        axis=1)                                                  # (L, 9, Ep)

    lnf = jnp.zeros((2, Ep), jnp.float32)
    lnf = lnf.at[0, :E].set(params['lnfg'].reshape(-1))
    lnf = lnf.at[1, :E].set(params['lnfb'].reshape(-1))
    wout = jnp.zeros((Ep, Vp), jnp.float32).at[:E, :V].set(
        params['wout']).astype(jnp.bfloat16)

    vmem = _vmem_limit_bytes()

    # ---------------- kernel 1: transformer blocks ----------------
    x_final = pl.pallas_call(
        make_block_kernel(B, Tp, Ep, E),
        out_shape=jax.ShapeDtypeStruct((N, Ep), jnp.float32),
        grid_spec=pltpu.PrefetchScalarGridSpec(
            num_scalar_prefetch=0,
            grid=(L,),
            in_specs=[
                pl.BlockSpec((N, Ep), lambda l: (0, 0)),           # x_emb (invariant)
                pl.BlockSpec((1, Ep, 5 * Ep), lambda l: (l, 0, 0)),  # weight slab
                pl.BlockSpec((1, 9, Ep), lambda l: (l, 0, 0)),       # vector slab
            ],
            out_specs=pl.BlockSpec((N, Ep), lambda l: (0, 0)),     # resident residual
        ),
        compiler_params=pltpu.CompilerParams(
            dimension_semantics=("arbitrary",),
            vmem_limit_bytes=vmem),
    )(x0, wall, vec)

    # ---------------- kernel 2: final LN + vocab projection ----------------
    rb = next(c for c in (512, 256, 128, 64, 32, 16, 8) if N % c == 0)
    tv = next(c for c in (2048, 1024, 512, 256, 128) if Vp % c == 0)

    logits_p = pl.pallas_call(
        make_head_kernel(E),
        out_shape=jax.ShapeDtypeStruct((N, Vp), jnp.float32),
        grid_spec=pltpu.PrefetchScalarGridSpec(
            num_scalar_prefetch=0,
            grid=(N // rb, Vp // tv),
            in_specs=[
                pl.BlockSpec((rb, Ep), lambda i, j: (i, 0)),       # x rows
                pl.BlockSpec((2, Ep), lambda i, j: (0, 0)),        # final LN g/b
                pl.BlockSpec((Ep, tv), lambda i, j: (0, j)),       # Wout column tile
            ],
            out_specs=pl.BlockSpec((rb, tv), lambda i, j: (i, j)),
        ),
        compiler_params=pltpu.CompilerParams(
            dimension_semantics=("parallel", "parallel"),
            vmem_limit_bytes=vmem),
    )(x_final, lnf, wout)

    return logits_p.reshape(B, Tp, Vp)[:, :T, :V]


# --------------------------------------------------------------------------
# Parameter init + pure-JAX f32 reference (for correctness check)
# --------------------------------------------------------------------------
def init_params(key, vocab_size, n_embd, n_layer):
    def nrm(k, shape, scale=0.02):
        return (jax.random.normal(k, shape) * scale).astype(jnp.float32)

    ks = jax.random.split(key, 16)
    return {
        'embed': nrm(ks[0], (vocab_size, n_embd), 0.1),
        'wq': nrm(ks[1], (n_layer, n_embd, n_embd)),
        'bq': nrm(ks[2], (n_layer, 1, n_embd)),
        'wk': nrm(ks[3], (n_layer, n_embd, n_embd)),
        'bk': nrm(ks[4], (n_layer, 1, n_embd)),
        'wv': nrm(ks[5], (n_layer, n_embd, n_embd)),
        'bv': nrm(ks[6], (n_layer, 1, n_embd)),
        'wo': nrm(ks[7], (n_layer, n_embd, n_embd)),
        'bo': nrm(ks[8], (n_layer, 1, n_embd)),
        'w1': nrm(ks[9], (n_layer, n_embd, n_embd)),
        'b1': nrm(ks[10], (n_layer, 1, n_embd)),
        'ln1g': (1.0 + 0.1 * jax.random.normal(ks[11], (n_layer, 1, n_embd))).astype(jnp.float32),
        'ln1b': nrm(ks[12], (n_layer, 1, n_embd), 0.1),
        'ln2g': (1.0 + 0.1 * jax.random.normal(ks[13], (n_layer, 1, n_embd))).astype(jnp.float32),
        'ln2b': nrm(ks[14], (n_layer, 1, n_embd), 0.1),
        'lnfg': jnp.ones((1, n_embd), jnp.float32),
        'lnfb': jnp.zeros((1, n_embd), jnp.float32),
        'wout': nrm(ks[15], (n_embd, vocab_size)),
    }


def _ln_ref(h, g, b):
    mu = jnp.mean(h, axis=-1, keepdims=True)
    var = jnp.mean((h - mu) ** 2, axis=-1, keepdims=True)
    return (h - mu) * jax.lax.rsqrt(var + LN_EPS) * g + b


def reference_forward(tokens, p):
    x = p['embed'][tokens].astype(jnp.float32)
    B, T, E = x.shape
    L = p['wq'].shape[0]
    row = jnp.arange(T)[:, None]
    col = jnp.arange(T)[None, :]
    causal = (col <= row)[None, :, :]
    for l in range(L):
        h = _ln_ref(x, p['ln1g'][l], p['ln1b'][l])
        q = h @ p['wq'][l] + p['bq'][l]
        k = h @ p['wk'][l] + p['bk'][l]
        v = h @ p['wv'][l] + p['bv'][l]
        s = jnp.einsum('bqe,bke->bqk', q, k) / math.sqrt(E)
        s = jnp.where(causal, s, -1e9)
        a = jax.nn.softmax(s, axis=-1)
        attn = jnp.einsum('bqk,bke->bqe', a, v) @ p['wo'][l] + p['bo'][l]
        x = x + attn
        h2 = _ln_ref(x, p['ln2g'][l], p['ln2b'][l])
        x = x + h2 @ p['w1'][l] + p['b1'][l]
    hf = _ln_ref(x, p['lnfg'], p['lnfb'])
    return hf @ p['wout']


if __name__ == "__main__":
    block_size, n_embd, n_layer, vocab_size = 8, 32, 2, 16
    B, T = 2, 8

    key = jax.random.PRNGKey(0)
    k_tok, k_par = jax.random.split(key)
    tokens = jax.random.randint(k_tok, (B, T), 0, vocab_size, dtype=jnp.int32)
    params = init_params(k_par, vocab_size, n_embd, n_layer)

    logits = character_gpt_forward(tokens, params)
    jax.block_until_ready(logits)

    ref = reference_forward(tokens, params)
    assert logits.shape == (B, T, vocab_size)
    # bf16 MXU inputs (f32 accumulation) -> loosened tolerance vs f32 reference.
    assert jnp.allclose(logits, ref, atol=2e-2, rtol=2e-2), "mismatch vs reference"

    print("KERNEL_OK")
</pallas_src>

<mosaic_0001>
module attributes {stable_mosaic.version = 11 : i64} {
  func.func @kernel(%arg0: i32, %arg1: memref<16x128xf32, #tpu.memory_space<vmem>>, %arg2: memref<1x128x640xbf16, #tpu.memory_space<vmem>>, %arg3: memref<1x9x128xf32, #tpu.memory_space<vmem>>, %arg4: memref<16x128xf32, #tpu.memory_space<vmem>>) attributes {dimension_semantics = [#tpu.dimension_semantics<arbitrary>], iteration_bounds = array<i64: 2>, scalar_prefetch = 0 : i64, scratch_operands = 0 : i64, tpu.core_type = #tpu.core_type<tc>, window_params = [{pipeline_mode = #tpu.pipeline_mode<synchronous>, transform_indices = @transform_0, window_bounds = array<i64: 16, 128>}, {transform_indices = @transform_1, window_bounds = array<i64: 1, 128, 640>}, {transform_indices = @transform_2, window_bounds = array<i64: 1, 9, 128>}, {pipeline_mode = #tpu.pipeline_mode<synchronous>, transform_indices = @transform_3, window_bounds = array<i64: 16, 128>}]} {
    %c0_i32 = arith.constant 0 : i32
    %0 = arith.cmpi eq, %arg0, %c0_i32 : i32
    %1 = arith.extui %0 : i1 to i32
    %c0_i32_0 = arith.constant 0 : i32
    %2 = arith.cmpi ne, %1, %c0_i32_0 : i32
    scf.if %2 {
      %c0_31 = arith.constant 0 : index
      %c0_32 = arith.constant 0 : index
      %115 = vector.load %arg1[%c0_31, %c0_32] : memref<16x128xf32, #tpu.memory_space<vmem>>, vector<16x128xf32>
      %c0_33 = arith.constant 0 : index
      %c0_34 = arith.constant 0 : index
      %116 = vector.load %arg4[%c0_33, %c0_34] : memref<16x128xf32, #tpu.memory_space<vmem>>, vector<16x128xf32>
      tpu.vector_store %arg4[%c0_33, %c0_34], %115 {strides = array<i32>} : memref<16x128xf32, #tpu.memory_space<vmem>>, vector<16x128xf32>,
    } else {
    }
    %c0 = arith.constant 0 : index
    %c0_1 = arith.constant 0 : index
    %c0_2 = arith.constant 0 : index
    %3 = vector.load %arg3[%c0, %c0_1, %c0_2] : memref<1x9x128xf32, #tpu.memory_space<vmem>>, vector<1x9x128xf32>
    %4 = vector.shape_cast %3 : vector<1x9x128xf32> to vector<9x128xf32>
    %5 = vector.extract_strided_slice %4 {offsets = [0, 0], sizes = [1, 128], strides = [1, 1]} : vector<9x128xf32> to vector<1x128xf32>
    %6 = vector.extract_strided_slice %4 {offsets = [1, 0], sizes = [1, 128], strides = [1, 1]} : vector<9x128xf32> to vector<1x128xf32>
    %7 = vector.extract_strided_slice %4 {offsets = [2, 0], sizes = [1, 128], strides = [1, 1]} : vector<9x128xf32> to vector<1x128xf32>
    %8 = vector.extract_strided_slice %4 {offsets = [3, 0], sizes = [1, 128], strides = [1, 1]} : vector<9x128xf32> to vector<1x128xf32>
    %9 = vector.extract_strided_slice %4 {offsets = [4, 0], sizes = [1, 128], strides = [1, 1]} : vector<9x128xf32> to vector<1x128xf32>
    %10 = vector.extract_strided_slice %4 {offsets = [5, 0], sizes = [1, 128], strides = [1, 1]} : vector<9x128xf32> to vector<1x128xf32>
    %11 = vector.extract_strided_slice %4 {offsets = [6, 0], sizes = [1, 128], strides = [1, 1]} : vector<9x128xf32> to vector<1x128xf32>
    %12 = vector.extract_strided_slice %4 {offsets = [7, 0], sizes = [1, 128], strides = [1, 1]} : vector<9x128xf32> to vector<1x128xf32>
    %13 = vector.extract_strided_slice %4 {offsets = [8, 0], sizes = [1, 128], strides = [1, 1]} : vector<9x128xf32> to vector<1x128xf32>
    %c0_3 = arith.constant 0 : index
    %c0_4 = arith.constant 0 : index
    %14 = vector.load %arg4[%c0_3, %c0_4] : memref<16x128xf32, #tpu.memory_space<vmem>>, vector<16x128xf32>
    %cst = arith.constant dense<0.000000e+00> : vector<16xf32>
    %15 = vector.multi_reduction <add>, %14, %cst [1] : vector<16x128xf32> to vector<16xf32>
    %16 = vector.shape_cast %15 : vector<16xf32> to vector<16x1xf32>
    %cst_5 = arith.constant 3.125000e-02 : f32
    %17 = vector.broadcast %cst_5 : f32 to vector<16x1xf32>
    %18 = arith.mulf %16, %17 : vector<16x1xf32>
    %19 = arith.mulf %14, %14 : vector<16x128xf32>
    %cst_6 = arith.constant dense<0.000000e+00> : vector<16xf32>
    %20 = vector.multi_reduction <add>, %19, %cst_6 [1] : vector<16x128xf32> to vector<16xf32>
    %21 = vector.shape_cast %20 : vector<16xf32> to vector<16x1xf32>
    %cst_7 = arith.constant 3.125000e-02 : f32
    %22 = vector.broadcast %cst_7 : f32 to vector<16x1xf32>
    %23 = arith.mulf %21, %22 : vector<16x1xf32>
    %24 = arith.mulf %18, %18 : vector<16x1xf32>
    %25 = arith.subf %23, %24 : vector<16x1xf32>
    %26 = vector.broadcast %18 : vector<16x1xf32> to vector<16x128xf32>
    %27 = arith.subf %14, %26 : vector<16x128xf32>
    %cst_8 = arith.constant 9.99999974E-6 : f32
    %28 = vector.broadcast %cst_8 : f32 to vector<16x1xf32>
    %29 = arith.addf %25, %28 : vector<16x1xf32>
    %30 = math.rsqrt %29 : vector<16x1xf32>
    %31 = vector.broadcast %30 : vector<16x1xf32> to vector<16x128xf32>
    %32 = arith.mulf %27, %31 : vector<16x128xf32>
    %33 = vector.broadcast %5 : vector<1x128xf32> to vector<16x128xf32>
    %34 = arith.mulf %32, %33 : vector<16x128xf32>
    %35 = vector.broadcast %6 : vector<1x128xf32> to vector<16x128xf32>
    %36 = arith.addf %34, %35 : vector<16x128xf32>
    %37 = arith.truncf %36 : vector<16x128xf32> to vector<16x128xbf16>
    %c0_9 = arith.constant 0 : index
    %c0_10 = arith.constant 0 : index
    %c0_11 = arith.constant 0 : index
    %38 = vector.load %arg2[%c0_9, %c0_10, %c0_11] : memref<1x128x640xbf16, #tpu.memory_space<vmem>>, vector<1x128x384xbf16>
    %39 = vector.shape_cast %38 : vector<1x128x384xbf16> to vector<128x384xbf16>
    %cst_12 = arith.constant dense<0.000000e+00> : vector<16x384xf32>
    %40 = tpu.matmul %37, %39, %cst_12 {dimension_numbers = #tpu.dot_dimension_numbers<[1], [0], [0], [1], [0, 0, 1, 1], [], []>} : vector<16x128xbf16>, vector<128x384xbf16>, vector<16x384xf32> -> vector<16x384xf32>
    %41 = vector.extract_strided_slice %40 {offsets = [0, 0], sizes = [16, 128], strides = [1, 1]} : vector<16x384xf32> to vector<16x128xf32>
    %42 = vector.broadcast %7 : vector<1x128xf32> to vector<16x128xf32>
    %43 = arith.addf %41, %42 : vector<16x128xf32>
    %44 = vector.shape_cast %43 : vector<16x128xf32> to vector<2x8x128xf32>
    %45 = arith.truncf %44 : vector<2x8x128xf32> to vector<2x8x128xbf16>
    %46 = vector.extract_strided_slice %40 {offsets = [0, 128], sizes = [16, 128], strides = [1, 1]} : vector<16x384xf32> to vector<16x128xf32>
    %47 = vector.broadcast %8 : vector<1x128xf32> to vector<16x128xf32>
    %48 = arith.addf %46, %47 : vector<16x128xf32>
    %49 = vector.shape_cast %48 : vector<16x128xf32> to vector<2x8x128xf32>
    %50 = arith.truncf %49 : vector<2x8x128xf32> to vector<2x8x128xbf16>
    %51 = vector.extract_strided_slice %40 {offsets = [0, 256], sizes = [16, 128], strides = [1, 1]} : vector<16x384xf32> to vector<16x128xf32>
    %52 = vector.broadcast %9 : vector<1x128xf32> to vector<16x128xf32>
    %53 = arith.addf %51, %52 : vector<16x128xf32>
    %54 = vector.shape_cast %53 : vector<16x128xf32> to vector<2x8x128xf32>
    %55 = arith.truncf %54 : vector<2x8x128xf32> to vector<2x8x128xbf16>
    "tpu.trace_start"() <{level = 10 : i32, message = "bqd,bkd->bqk"}> : () -> ()
    %cst_13 = arith.constant dense<0.000000e+00> : vector<2x8x8xf32>
    %56 = tpu.matmul %45, %50, %cst_13 {dimension_numbers = #tpu.dot_dimension_numbers<[2], [2], [1], [1], [0, 0, 0, 1, 1, 1], [0], [0]>} : vector<2x8x128xbf16>, vector<2x8x128xbf16>, vector<2x8x8xf32> -> vector<2x8x8xf32>
    "tpu.trace_stop"() : () -> ()
    %57 = tpu.iota {dimensions = array<i32: 0>} : vector<8x8xi32>
    %58 = tpu.iota {dimensions = array<i32: 1>} : vector<8x8xi32>
    %59 = arith.cmpi sle, %58, %57 : vector<8x8xi32>
    %60 = vector.shape_cast %59 : vector<8x8xi1> to vector<1x8x8xi1>
    %cst_14 = arith.constant -1.000000e+09 : f32
    %61 = vector.shape_cast %60 : vector<1x8x8xi1> to vector<1x8x8xi1>
    %62 = vector.broadcast %61 : vector<1x8x8xi1> to vector<2x8x8xi1>
    %63 = vector.broadcast %cst_14 : f32 to vector<2x8x8xf32>
    %64 = arith.select %62, %56, %63 : vector<2x8x8xi1>, vector<2x8x8xf32>
    %cst_15 = arith.constant dense<0xFF800000> : vector<2x8xf32>
    %65 = vector.multi_reduction <maximumf>, %64, %cst_15 [2] : vector<2x8x8xf32> to vector<2x8xf32>
    %66 = vector.shape_cast %65 : vector<2x8xf32> to vector<2x8x1xf32>
    %67 = vector.broadcast %66 : vector<2x8x1xf32> to vector<2x8x8xf32>
    %68 = arith.subf %64, %67 : vector<2x8x8xf32>
    %69 = math.exp %68 : vector<2x8x8xf32>
    %cst_16 = arith.constant dense<0.000000e+00> : vector<2x8xf32>
    %70 = vector.multi_reduction <add>, %69, %cst_16 [2] : vector<2x8x8xf32> to vector<2x8xf32>
    %71 = vector.shape_cast %70 : vector<2x8xf32> to vector<2x8x1xf32>
    %72 = tpu.reciprocal %71 {approx = true} : vector<2x8x1xf32> -> vector<2x8x1xf32>
    %73 = vector.broadcast %72 : vector<2x8x1xf32> to vector<2x8x8xf32>
    %74 = arith.mulf %69, %73 : vector<2x8x8xf32>
    %75 = arith.truncf %74 : vector<2x8x8xf32> to vector<2x8x8xbf16>
    "tpu.trace_start"() <{level = 10 : i32, message = "bqk,bkd->bqd"}> : () -> ()
    %cst_17 = arith.constant dense<0.000000e+00> : vector<2x8x128xf32>
    %76 = tpu.matmul %75, %55, %cst_17 {dimension_numbers = #tpu.dot_dimension_numbers<[2], [1], [1], [2], [0, 0, 0, 1, 1, 2], [0], [0]>} : vector<2x8x8xbf16>, vector<2x8x128xbf16>, vector<2x8x128xf32> -> vector<2x8x128xf32>
    "tpu.trace_stop"() : () -> ()
    %77 = vector.shape_cast %76 : vector<2x8x128xf32> to vector<16x128xf32>
    %78 = arith.truncf %77 : vector<16x128xf32> to vector<16x128xbf16>
    %c0_18 = arith.constant 0 : index
    %c0_19 = arith.constant 0 : index
    %c384 = arith.constant 384 : index
    %79 = vector.load %arg2[%c0_18, %c0_19, %c384] : memref<1x128x640xbf16, #tpu.memory_space<vmem>>, vector<1x128x128xbf16>
    %80 = vector.shape_cast %79 : vector<1x128x128xbf16> to vector<128x128xbf16>
    %cst_20 = arith.constant dense<0.000000e+00> : vector<16x128xf32>
    %81 = tpu.matmul %78, %80, %cst_20 {dimension_numbers = #tpu.dot_dimension_numbers<[1], [0], [0], [1], [0, 0, 1, 1], [], []>} : vector<16x128xbf16>, vector<128x128xbf16>, vector<16x128xf32> -> vector<16x128xf32>
    %82 = vector.broadcast %10 : vector<1x128xf32> to vector<16x128xf32>
    %83 = arith.addf %81, %82 : vector<16x128xf32>
    %84 = arith.addf %14, %83 : vector<16x128xf32>
    %cst_21 = arith.constant dense<0.000000e+00> : vector<16xf32>
    %85 = vector.multi_reduction <add>, %84, %cst_21 [1] : vector<16x128xf32> to vector<16xf32>
    %86 = vector.shape_cast %85 : vector<16xf32> to vector<16x1xf32>
    %cst_22 = arith.constant 3.125000e-02 : f32
    %87 = vector.broadcast %cst_22 : f32 to vector<16x1xf32>
    %88 = arith.mulf %86, %87 : vector<16x1xf32>
    %89 = arith.mulf %84, %84 : vector<16x128xf32>
    %cst_23 = arith.constant dense<0.000000e+00> : vector<16xf32>
    %90 = vector.multi_reduction <add>, %89, %cst_23 [1] : vector<16x128xf32> to vector<16xf32>
    %91 = vector.shape_cast %90 : vector<16xf32> to vector<16x1xf32>
    %cst_24 = arith.constant 3.125000e-02 : f32
    %92 = vector.broadcast %cst_24 : f32 to vector<16x1xf32>
    %93 = arith.mulf %91, %92 : vector<16x1xf32>
    %94 = arith.mulf %88, %88 : vector<16x1xf32>
    %95 = arith.subf %93, %94 : vector<16x1xf32>
    %96 = vector.broadcast %88 : vector<16x1xf32> to vector<16x128xf32>
    %97 = arith.subf %84, %96 : vector<16x128xf32>
    %cst_25 = arith.constant 9.99999974E-6 : f32
    %98 = vector.broadcast %cst_25 : f32 to vector<16x1xf32>
    %99 = arith.addf %95, %98 : vector<16x1xf32>
    %100 = math.rsqrt %99 : vector<16x1xf32>
    %101 = vector.broadcast %100 : vector<16x1xf32> to vector<16x128xf32>
    %102 = arith.mulf %97, %101 : vector<16x128xf32>
    %103 = vector.broadcast %11 : vector<1x128xf32> to vector<16x128xf32>
    %104 = arith.mulf %102, %103 : vector<16x128xf32>
    %105 = vector.broadcast %12 : vector<1x128xf32> to vector<16x128xf32>
    %106 = arith.addf %104, %105 : vector<16x128xf32>
    %107 = arith.truncf %106 : vector<16x128xf32> to vector<16x128xbf16>
    %c0_26 = arith.constant 0 : index
    %c0_27 = arith.constant 0 : index
    %c512 = arith.constant 512 : index
    %108 = vector.load %arg2[%c0_26, %c0_27, %c512] : memref<1x128x640xbf16, #tpu.memory_space<vmem>>, vector<1x128x128xbf16>
    %109 = vector.shape_cast %108 : vector<1x128x128xbf16> to vector<128x128xbf16>
    %cst_28 = arith.constant dense<0.000000e+00> : vector<16x128xf32>
    %110 = tpu.matmul %107, %109, %cst_28 {dimension_numbers = #tpu.dot_dimension_numbers<[1], [0], [0], [1], [0, 0, 1, 1], [], []>} : vector<16x128xbf16>, vector<128x128xbf16>, vector<16x128xf32> -> vector<16x128xf32>
    %111 = arith.addf %84, %110 : vector<16x128xf32>
    %112 = vector.broadcast %13 : vector<1x128xf32> to vector<16x128xf32>
    %113 = arith.addf %111, %112 : vector<16x128xf32>
    %c0_29 = arith.constant 0 : index
    %c0_30 = arith.constant 0 : index
    %114 = vector.load %arg4[%c0_29, %c0_30] : memref<16x128xf32, #tpu.memory_space<vmem>>, vector<16x128xf32>
    tpu.vector_store %arg4[%c0_29, %c0_30], %113 {strides = array<i32>} : memref<16x128xf32, #tpu.memory_space<vmem>>, vector<16x128xf32>,
    return
  }
  func.func @transform_0(%arg0: i32) -> (i32, i32) {
    %c0_i32 = arith.constant 0 : i32
    %c0_i32_0 = arith.constant 0 : i32
    %c0_i32_1 = arith.constant 0 : i32
    return %c0_i32, %c0_i32_0 : i32, i32
  }
  func.func @transform_1(%arg0: i32) -> (i32, i32, i32) {
    %c0_i32 = arith.constant 0 : i32
    %c0_i32_0 = arith.constant 0 : i32
    %c0_i32_1 = arith.constant 0 : i32
    return %arg0, %c0_i32, %c0_i32_0 : i32, i32, i32
  }
  func.func @transform_2(%arg0: i32) -> (i32, i32, i32) {
    %c0_i32 = arith.constant 0 : i32
    %c0_i32_0 = arith.constant 0 : i32
    %c0_i32_1 = arith.constant 0 : i32
    return %arg0, %c0_i32, %c0_i32_0 : i32, i32, i32
  }
  func.func @transform_3(%arg0: i32) -> (i32, i32) {
    %c0_i32 = arith.constant 0 : i32
    %c0_i32_0 = arith.constant 0 : i32
    %c0_i32_1 = arith.constant 0 : i32
    return %c0_i32, %c0_i32_0 : i32, i32
  }
}

</mosaic_0001>

<llo_original>
// kernel: tpu_custom_call.1
$region0: #{tpu_custom_call.1}
  #allocation0 [shape = 'u32[]', space=smem, size = 0x4, offset = 0x4, fixed_abs, tag = 'smem constant byte address 0x4 - core index']
  #allocation1 [shape = 'u32[144,128]{1,0:T(1,128)}', space=vmem, size = 0x12000, scoped, tag = 'internal scratch']
  %s0 = inlined_call_operand.vmem [shape: f32[16,128], index: 0, kind: input, shape index: {}]
  %s1 = inlined_call_operand.hbm [shape: bf16[2,128,640], index: 1, kind: input, shape index: {}]
  %s2 = inlined_call_operand.vmem [shape: f32[2,9,128], index: 2, kind: input, shape index: {}]
  %s3 = inlined_call_operand.hbm [shape: f32[16,128], index: 3, kind: output, shape index: {}]
  %s4 = sld [smem:[#allocation0]]
  $region53: #{tpu_custom_call.1} parent=0
    _
  %s6 = ssub.s32 1, %s4
  %s7 = scalar_select 0, %s6, %s4
  $region1: #{tpu_custom_call.1} parent=0
    #allocation2 [shape = 'u8[327680]{0}', space=vmem, size = 0x50000, scoped, tag = 'input window, operand 1']
    #allocation3 [shape = 's32[2]{0}', space=sflag, size = 0x8, scoped, tag = 'scoped memory for tpu_custom_call.1']
    #allocation4 [shape = 's32[2]{0}', space=sflag, size = 0x8, scoped, tag = 'scoped memory for tpu_custom_call.1']
    #allocation5 [shape = 'u8[8192]{0}', space=vmem, size = 0x2000, scoped, tag = 'output window, operand 0, single buffered']
    %8 = vsyncpa [#allocation3], 0
    %s9 = scalar_lea.sflag [#allocation3], 1
    %10 = vsyncpa %s9, 0
    %11 = vsyncpa [#allocation4], 0
    loop: start=0, step=1, limit=4
    $region2: #{tpu_custom_call.1} parent=1 // loop_pre_header
      _
    $region3: #{tpu_custom_call.1} parent=1 // loop_header
      %s13 = sphi 0, %s17
      %p14 = scmp.ge.s32.totalorder %s13, 4
      %s21 = sphi 0, %s21
      %s23 = sphi 0, %s21
      %s24 = sphi 0, %s23
      %s38 = sphi 0, %s24
      %s44 = sphi 0, %s46
      %s47 = sphi 0, %s44
      %s48 = sphi 0, %s47
      %s64 = sphi 0, %s48
      %s70 = sphi 0, %s72
      %s73 = sphi 0, %s70
      %s74 = sphi 0, %s73
      %s90 = sphi 0, %s74
      %s94 = sphi 0, %s94
      %s96 = sphi 0, %s94
      %s97 = sphi 0, %s96
      %s111 = sphi 0, %s97
    $region4: #{tpu_custom_call.1} parent=1 // loop_header_branch
      %16 = sbr.rel (%p14) target = $region8
    $region5: #{tpu_custom_call.1} parent=1 // loop_body
      %s18 = ssub.s32 %s13, 1
      %s19 = ssub.s32 %s13, 2
      %s20 = sadd.s32 %s13, 1
      %s22 = sadd.s32 %s21, 1
      %p25 = scmp.eq.s32.totalorder %s13, 1
      %p26 = scmp.ne.s32.totalorder %s21, %s23
      %p27 = scmp.eq.s32.totalorder %s13, 0
      %p28 = por %p26, %p27
      %p29 = scmp.ne.s32.totalorder %s21, %s23
      %p30 = scmp.eq.s32.totalorder %s18, 1
      %p31 = por %p29, %p30
      %p32 = scmp.ne.s32.totalorder %s23, %s24
      %p33 = scmp.eq.s32.totalorder %s18, 0
      %p34 = por %p32, %p33
      %p35 = scmp.ne.s32.totalorder %s23, %s24
      %p36 = scmp.eq.s32.totalorder %s19, 1
      %p37 = por %p35, %p36
      %p39 = scmp.ne.s32.totalorder %s24, %s38
      %p40 = scmp.eq.s32.totalorder %s19, 0
      %p41 = por %p39, %p40
      %s42 = ssub.s32 %s13, %s20
      %p43 = scmp.eq.s32.totalorder %s42, 0
      %s45 = sadd.s32 %s44, 1
      %s46 = scalar_select %p43, %s44, %s45
      %p49 = pneg %p43
      %p50 = scmp.eq.s32.totalorder %s13, 1
      %p51 = por %p49, %p50
      %p52 = scmp.ne.s32.totalorder %s44, %s47
      %p53 = scmp.eq.s32.totalorder %s13, 0
      %p54 = por %p52, %p53
      %p55 = scmp.ne.s32.totalorder %s44, %s47
      %p56 = scmp.eq.s32.totalorder %s18, 1
      %p57 = por %p55, %p56
      %p58 = scmp.ne.s32.totalorder %s47, %s48
      %p59 = scmp.eq.s32.totalorder %s18, 0
      %p60 = por %p58, %p59
      %p61 = scmp.ne.s32.totalorder %s47, %s48
      %p62 = scmp.eq.s32.totalorder %s19, 1
      %p63 = por %p61, %p62
      %p65 = scmp.ne.s32.totalorder %s48, %s64
      %p66 = scmp.eq.s32.totalorder %s19, 0
      %p67 = por %p65, %p66
      %s68 = ssub.s32 %s13, %s20
      %p69 = scmp.eq.s32.totalorder %s68, 0
      %s71 = sadd.s32 %s70, 1
      %s72 = scalar_select %p69, %s70, %s71
      %p75 = pneg %p69
      %p76 = scmp.eq.s32.totalorder %s13, 1
      %p77 = por %p75, %p76
      %p78 = scmp.ne.s32.totalorder %s70, %s73
      %p79 = scmp.eq.s32.totalorder %s13, 0
      %p80 = por %p78, %p79
      %p81 = scmp.ne.s32.totalorder %s70, %s73
      %p82 = scmp.eq.s32.totalorder %s18, 1
      %p83 = por %p81, %p82
      %p84 = scmp.ne.s32.totalorder %s73, %s74
      %p85 = scmp.eq.s32.totalorder %s18, 0
      %p86 = por %p84, %p85
      %p87 = scmp.ne.s32.totalorder %s73, %s74
      %p88 = scmp.eq.s32.totalorder %s19, 1
      %p89 = por %p87, %p88
      %p91 = scmp.ne.s32.totalorder %s74, %s90
      %p92 = scmp.eq.s32.totalorder %s19, 0
      %p93 = por %p91, %p92
      %s95 = sadd.s32 %s94, 1
      %p98 = scmp.eq.s32.totalorder %s13, 1
      %p99 = scmp.ne.s32.totalorder %s94, %s96
      %p100 = scmp.eq.s32.totalorder %s13, 0
      %p101 = por %p99, %p100
      %p102 = scmp.ne.s32.totalorder %s94, %s96
      %p103 = scmp.eq.s32.totalorder %s18, 1
      %p104 = por %p102, %p103
      %p105 = scmp.ne.s32.totalorder %s96, %s97
      %p106 = scmp.eq.s32.totalorder %s18, 0
      %p107 = por %p105, %p106
      %p108 = scmp.ne.s32.totalorder %s96, %s97
      %p109 = scmp.eq.s32.totalorder %s19, 1
      %p110 = por %p108, %p109
      %p112 = scmp.ne.s32.totalorder %s97, %s111
      %p113 = scmp.eq.s32.totalorder %s19, 0
      %p114 = por %p112, %p113
      %p115 = scmp.le.s32.totalorder 1, %s13
      %p116 = scmp.lt.s32.totalorder %s13, 3
      %p117 = pnand %p115, %p116
      %p118 = pneg %p117
      // Predicated region
      $region9: #{tpu_custom_call.1} parent=5 // pred_check
        _
      $region10: #{tpu_custom_call.1} parent=5 // pred_check_branch
        %120 = sbr.rel (%p117) target = $region12
      $region11: #{tpu_custom_call.1} parent=5 // pred_region
        %s121 = ssub.s32 %s13, 1
        // Predicated region
        $region13: #{tpu_custom_call.1} parent=11 // pred_check
          %p122 = pneg %p34
        $region14: #{tpu_custom_call.1} parent=11 // pred_check_branch
          %124 = sbr.rel (%p122) target = $region16
        $region15: #{tpu_custom_call.1} parent=11 // pred_region
          _
        $region16: #{tpu_custom_call.1} parent=11 // pred_fallthru
          _
      $region12: #{tpu_custom_call.1} parent=5 // pred_fallthru
        _
      %p125 = scmp.lt.s32.totalorder %s13, 2
      // Predicated region
      $region17: #{tpu_custom_call.1} parent=5 // pred_check
        %p126 = pneg %p125
      $region18: #{tpu_custom_call.1} parent=5 // pred_check_branch
        %128 = sbr.rel (%p126) target = $region20
      $region19: #{tpu_custom_call.1} parent=5 // pred_region
        // Predicated region
        $region21: #{tpu_custom_call.1} parent=19 // pred_check
          %p129 = pneg %p54
        $region22: #{tpu_custom_call.1} parent=19 // pred_check_branch
          %131 = sbr.rel (%p129) target = $region24
        $region23: #{tpu_custom_call.1} parent=19 // pred_region
          %s132 = sand.u32 %s44, 1
          %s133 = scalar_lea.sflag [#allocation3], %s132
          %s134 = sand.u32 %s44, 1
          %s135 = smul.addr %s134, 320
          %s136 = scalar_lea.vmem [#allocation2], %s135
          %s138 = ssub.s32 5120, 5120
          %139 = vsyncadd %s133, %s138
          %s140 = smul.addr %s13, 80
          %s141 = smul.addr %s140, 64
          %s142 = scalar_lea.hbm %s1, %s141
          %s143 = sshll.u32 %s136, 4
          %s144 = int_to_ptr.vmem [resolvable:$true] %s143
          %149 = dma.hbm_to_vmem [thread:$0]  %s142, 5120, %s144, %s133, 320, 320, 20
        $region24: #{tpu_custom_call.1} parent=19 // pred_fallthru
          _
        // Predicated region
        $region25: #{tpu_custom_call.1} parent=19 // pred_check
          %p150 = pneg %p80
        $region26: #{tpu_custom_call.1} parent=19 // pred_check_branch
          %152 = sbr.rel (%p150) target = $region28
        $region27: #{tpu_custom_call.1} parent=19 // pred_region
          %p153 = scmp.lt.s32.totalorder %s13, 1
          %s154 = scalar_select %p153, %s13, 1
          %s155 = smul.addr %s154, 2
          %s156 = smul.addr %s155, 8
          %s157 = scalar_lea.vmem %s2, %s156
        $region28: #{tpu_custom_call.1} parent=19 // pred_fallthru
          _
      $region20: #{tpu_custom_call.1} parent=5 // pred_fallthru
        _
      %p158 = scmp.le.s32.totalorder 1, %s13
      %p159 = scmp.lt.s32.totalorder %s13, 3
      %p160 = pnand %p158, %p159
      %p161 = pneg %p160
      // Predicated region
      $region29: #{tpu_custom_call.1} parent=5 // pred_check
        _
      $region30: #{tpu_custom_call.1} parent=5 // pred_check_branch
        %163 = sbr.rel (%p160) target = $region32
      $region31: #{tpu_custom_call.1} parent=5 // pred_region
        %s164 = ssub.s32 %s13, 1
        %s165 = sand.u32 %s47, 1
        %s166 = scalar_lea.sflag [#allocation3], %s165
        %s167 = sand.u32 %s47, 1
        %s168 = smul.addr %s167, 320
        %s169 = scalar_lea.vmem [#allocation2], %s168
        // Predicated region
        $region33: #{tpu_custom_call.1} parent=31 // pred_check
          %p170 = pneg %p60
        $region34: #{tpu_custom_call.1} parent=31 // pred_check_branch
          %172 = sbr.rel (%p170) target = $region36
        $region35: #{tpu_custom_call.1} parent=31 // pred_region
          %173 = dma.done %s166, 5120
        $region36: #{tpu_custom_call.1} parent=31 // pred_fallthru
          _
        %p174 = pneg %p34
        %p175 = pneg %p31
        %s176 = sand.u32 %s47, 1
        %s177 = scalar_lea.sflag [#allocation3], %s176
        %s178 = sand.u32 %s47, 1
        %s179 = smul.addr %s178, 320
        %s180 = scalar_lea.vmem [#allocation2], %s179
        %p181 = pneg %p60
        %p182 = pneg %p57
        %p183 = scmp.lt.s32.totalorder %s18, 1
        %s184 = scalar_select %p183, %s18, 1
        %s185 = smul.addr %s184, 2
        %s186 = smul.addr %s185, 8
        %s187 = scalar_lea.vmem %s2, %s186
        %p188 = pneg %p86
        %p189 = pneg %p83
        %p190 = pneg %p107
        %p191 = pneg %p104
        %p192 = scmp.lt.s32.totalorder %s18, 1
        %s193 = scalar_select %p192, %s18, 1
        %s194 = smul.addr %s193, 2
        %s195 = smul.addr %s194, 8
        %s196 = scalar_lea.vmem %s2, %s195
        %p198 = scmp.eq.s32.totalorder %s18, 0
        // Predicated region
        $region37: #{tpu_custom_call.1} parent=31 // pred_check
          %p199 = pneg %p198
        $region38: #{tpu_custom_call.1} parent=31 // pred_check_branch
          %201 = sbr.rel (%p199) target = $region40
        $region39: #{tpu_custom_call.1} parent=31 // pred_region
          %v202 = vld [vmem:[%s0] sm:$0xff]
          %v203 = vld [vmem:[%s0 + $0x8] sm:$0xff]
          %204 = vst [vmem:[#allocation5] sm:$0xff] %v202
          %205 = vst [vmem:[#allocation5 + $0x8] sm:$0xff] %v203
        $region40: #{tpu_custom_call.1} parent=31 // pred_fallthru
          _
        %v206 = vld [vmem:[%s196] sm:$0xff]
        %v207 = vld [vmem:[%s196 + $0x8] sm:$0x1]
        %v208 = vld [vmem:[#allocation5] sm:$0xff]
        %v209 = vld [vmem:[#allocation5 + $0x8] sm:$0xff]
        %210 = vadd.xlane.f32.xlu0 %v208
        %v211 = vpop.xlane.xlu0 %210
        %212 = vadd.xlane.f32.xlu0 %v209
        %v213 = vpop.xlane.xlu0 %212
        %v214 = vmul.f32 %v211, 0.03125
        %v215 = vmul.f32 %v213, 0.03125
        %v216 = vmul.f32 %v208, %v208
        %v217 = vmul.f32 %v209, %v209
        %218 = vadd.xlane.f32.xlu0 %v216
        %v219 = vpop.xlane.xlu0 %218
        %220 = vadd.xlane.f32.xlu0 %v217
        %v221 = vpop.xlane.xlu0 %220
        %v222 = vmul.f32 %v219, 0.03125
        %v223 = vmul.f32 %v221, 0.03125
        %v224 = vmul.f32 %v214, %v214
        %v225 = vmul.f32 %v215, %v215
        %v226 = vsub.f32 %v222, %v224
        %v227 = vsub.f32 %v223, %v225
        %v228 = vsub.f32 %v208, %v214
        %v229 = vsub.f32 %v209, %v215
        %v230 = vadd.f32 %v226, 1e-05
        %v231 = vadd.f32 %v227, 1e-05
        %v232 = vrsqrt.pop %v230
        %v233 = vrsqrt.pop %v231
        %v234 = vmul.f32 %v228, %v232
        %v235 = vmul.f32 %v229, %v233
        %v236 = vlaneseq
        %v237 = vshrl.u32 %v236, 7
        %v238 = vsub.s32 0, %v237
        %v239 = vrot.slane %v206, %v238
        %v240 = vmul.f32 %v234, %v239
        %v241 = vmul.f32 %v235, %v239
        %v242 = vlaneseq
        %v243 = vshrl.u32 %v242, 7
        %v244 = vsub.s32 1, %v243
        %v245 = vrot.slane %v206, %v244
        %v246 = vadd.f32 %v240, %v245
        %v247 = vadd.f32 %v241, %v245
        %v248 = vpack.c.bf16 %v247, %v246
        %v249 = vld [vmem:[%s169] sm:$0xff]
        %v250 = vld [vmem:[%s169 + $0x8] sm:$0xf]
        %v251 = vld [vmem:[%s169 + $0x14] sm:$0xff]
        %v252 = vld [vmem:[%s169 + $0x1c] sm:$0xf]
        %v253 = vld [vmem:[%s169 + $0x28] sm:$0xff]
        %v254 = vld [vmem:[%s169 + $0x30] sm:$0xf]
        %v255 = vld [vmem:[%s169 + $0x3c] sm:$0xff]
        %v256 = vld [vmem:[%s169 + $0x44] sm:$0xf]
        %v257 = vld [vmem:[%s169 + $0x50] sm:$0xff]
        %v258 = vld [vmem:[%s169 + $0x58] sm:$0xf]
        %v259 = vld [vmem:[%s169 + $0x64] sm:$0xff]
        %v260 = vld [vmem:[%s169 + $0x6c] sm:$0xf]
        %v261 = vld [vmem:[%s169 + $0x78] sm:$0xff]
        %v262 = vld [vmem:[%s169 + $0x80] sm:$0xf]
        %v263 = vld [vmem:[%s169 + $0x8c] sm:$0xff]
        %v264 = vld [vmem:[%s169 + $0x94] sm:$0xf]
        %v265 = vld [vmem:[%s169 + $0xa0] sm:$0xff]
        %v266 = vld [vmem:[%s169 + $0xa8] sm:$0xf]
        %v267 = vld [vmem:[%s169 + $0xb4] sm:$0xff]
        %v268 = vld [vmem:[%s169 + $0xbc] sm:$0xf]
        %v269 = vld [vmem:[%s169 + $0xc8] sm:$0xff]
        %v270 = vld [vmem:[%s169 + $0xd0] sm:$0xf]
        %v271 = vld [vmem:[%s169 + $0xdc] sm:$0xff]
        %v272 = vld [vmem:[%s169 + $0xe4] sm:$0xf]
        %v273 = vld [vmem:[%s169 + $0xf0] sm:$0xff]
        %v274 = vld [vmem:[%s169 + $0xf8] sm:$0xf]
        %v275 = vld [vmem:[%s169 + $0x104] sm:$0xff]
        %v276 = vld [vmem:[%s169 + $0x10c] sm:$0xf]
        %v277 = vld [vmem:[%s169 + $0x118] sm:$0xff]
        %v278 = vld [vmem:[%s169 + $0x120] sm:$0xf]
        %v279 = vld [vmem:[%s169 + $0x12c] sm:$0xff]
        %v280 = vld [vmem:[%s169 + $0x134] sm:$0xf]
        %v313 = vunpack.c.l.b16 %v249
        %v314 = vunpack.c.h.b16 %v249
        %v315 = vunpack.c.l.b16 %v250
        %v316 = vunpack.c.l.b16 %v251
        %v317 = vunpack.c.h.b16 %v251
        %v318 = vunpack.c.l.b16 %v252
        %v319 = vunpack.c.l.b16 %v253
        %v320 = vunpack.c.h.b16 %v253
        %v321 = vunpack.c.l.b16 %v254
        %v322 = vunpack.c.l.b16 %v255
        %v323 = vunpack.c.h.b16 %v255
        %v324 = vunpack.c.l.b16 %v256
        %v325 = vunpack.c.l.b16 %v257
        %v326 = vunpack.c.h.b16 %v257
        %v327 = vunpack.c.l.b16 %v258
        %v328 = vunpack.c.l.b16 %v259
        %v329 = vunpack.c.h.b16 %v259
        %v330 = vunpack.c.l.b16 %v260
        %v331 = vunpack.c.l.b16 %v261
        %v332 = vunpack.c.h.b16 %v261
        %v333 = vunpack.c.l.b16 %v262
        %v334 = vunpack.c.l.b16 %v263
        %v335 = vunpack.c.h.b16 %v263
        %v336 = vunpack.c.l.b16 %v264
        %v337 = vunpack.c.l.b16 %v265
        %v338 = vunpack.c.h.b16 %v265
        %v339 = vunpack.c.l.b16 %v266
        %v340 = vunpack.c.l.b16 %v267
        %v341 = vunpack.c.h.b16 %v267
        %v342 = vunpack.c.l.b16 %v268
        %v343 = vunpack.c.l.b16 %v269
        %v344 = vunpack.c.h.b16 %v269
        %v345 = vunpack.c.l.b16 %v270
        %v346 = vunpack.c.l.b16 %v271
        %v347 = vunpack.c.h.b16 %v271
        %v348 = vunpack.c.l.b16 %v272
        %v349 = vunpack.c.l.b16 %v273
        %v350 = vunpack.c.h.b16 %v273
        %v351 = vunpack.c.l.b16 %v274
        %v352 = vunpack.c.l.b16 %v275
        %v353 = vunpack.c.h.b16 %v275
        %v354 = vunpack.c.l.b16 %v276
        %v355 = vunpack.c.l.b16 %v277
        %v356 = vunpack.c.h.b16 %v277
        %v357 = vunpack.c.l.b16 %v278
        %v358 = vunpack.c.l.b16 %v279
        %v359 = vunpack.c.h.b16 %v279
        %v360 = vunpack.c.l.b16 %v280
        %v361 = vpack.c.b16 %v316, %v313
        %v362 = vpack.c.b16 %v317, %v314
        %v363 = vpack.c.b16 %v318, %v315
        %v364 = vpack.c.b16 %v322, %v319
        %v365 = vpack.c.b16 %v323, %v320
        %v366 = vpack.c.b16 %v324, %v321
        %v367 = vpack.c.b16 %v328, %v325
        %v368 = vpack.c.b16 %v329, %v326
        %v369 = vpack.c.b16 %v330, %v327
        %v370 = vpack.c.b16 %v334, %v331
        %v371 = vpack.c.b16 %v335, %v332
        %v372 = vpack.c.b16 %v336, %v333
        %v373 = vpack.c.b16 %v340, %v337
        %v374 = vpack.c.b16 %v341, %v338
        %v375 = vpack.c.b16 %v342, %v339
        %v376 = vpack.c.b16 %v346, %v343
        %v377 = vpack.c.b16 %v347, %v344
        %v378 = vpack.c.b16 %v348, %v345
        %v379 = vpack.c.b16 %v352, %v349
        %v380 = vpack.c.b16 %v353, %v350
        %v381 = vpack.c.b16 %v354, %v351
        %v382 = vpack.c.b16 %v358, %v355
        %v383 = vpack.c.b16 %v359, %v356
        %v384 = vpack.c.b16 %v360, %v357
        %409 = vmatprep.subr.bf16.mxu0 %v362
        %410 = vmatpush1.bf16.msra.mxu0 %v361
        %411 = vmatprep.subr.bf16.mxu0 %v365
        %412 = vmatpush1.bf16.msra.mxu0 %v364
        %413 = vmatprep.subr.bf16.mxu0 %v368
        %414 = vmatpush1.bf16.msra.mxu0 %v367
        %415 = vmatprep.subr.bf16.mxu0 %v371
        %416 = vmatpush1.bf16.msra.mxu0 %v370
        %417 = vmatprep.subr.bf16.mxu0 %v374
        %418 = vmatpush1.bf16.msra.mxu0 %v373
        %419 = vmatprep.subr.bf16.mxu0 %v377
        %420 = vmatpush1.bf16.msra.mxu0 %v376
        %421 = vmatprep.subr.bf16.mxu0 %v380
        %422 = vmatpush1.bf16.msra.mxu0 %v379
        %423 = vmatprep.subr.bf16.mxu0 %v383
        %424 = vmatpush1.bf16.msra.mxu0 %v382
        %425 = vmatprep.subr.bf16.mxu0 0
        %426 = vmatpush1.bf16.msra.mxu0 0
        %427 = vmatprep.subr.bf16.mxu0 0
        %428 = vmatpush1.bf16.msra.mxu0 0
        %429 = vmatprep.subr.bf16.mxu0 0
        %430 = vmatpush1.bf16.msra.mxu0 0
        %431 = vmatprep.subr.bf16.mxu0 0
        %432 = vmatpush1.bf16.msra.mxu0 0
        %433 = vmatprep.subr.bf16.mxu0 0
        %434 = vmatpush1.bf16.msra.mxu0 0
        %435 = vmatprep.subr.bf16.mxu0 0
        %436 = vmatpush1.bf16.msra.mxu0 0
        %437 = vmatprep.subr.bf16.mxu0 0
        %438 = vmatpush1.bf16.msra.mxu0 0
        %439 = vmatprep.subr.bf16.mxu0 0
        %440 = vmatpush1.bf16.msra.mxu0 0
        %441 = vmatprep.mubr.bf16.mxu0 0
        %442 = vmatmul.mubr.bf16.gmra.mrb[0].mxu0 %v248
        %v443 = vpop.f32.mrb[0].mxu0
        %v444 = vadd.f32 0.0, %v443
        %v445 = vpop.f32.mrb[0].mxu0
        %v446 = vadd.f32 0.0, %v445
        %v447 = vpop.f32.mrb[0].mxu0
        %v448 = vadd.f32 0.0, %v447
        %v449 = vpop.f32.mrb[0].mxu0
        %v450 = vadd.f32 0.0, %v449
        %451 = vdwg.mxu0
        %452 = vmatprep.subr.bf16.mxu0 0
        %453 = vmatpush1.bf16.msra.mxu0 %v363
        %454 = vmatprep.subr.bf16.mxu0 0
        %455 = vmatpush1.bf16.msra.mxu0 %v366
        %456 = vmatprep.subr.bf16.mxu0 0
        %457 = vmatpush1.bf16.msra.mxu0 %v369
        %458 = vmatprep.subr.bf16.mxu0 0
        %459 = vmatpush1.bf16.msra.mxu0 %v372
        %460 = vmatprep.subr.bf16.mxu0 0
        %461 = vmatpush1.bf16.msra.mxu0 %v375
        %462 = vmatprep.subr.bf16.mxu0 0
        %463 = vmatpush1.bf16.msra.mxu0 %v378
        %464 = vmatprep.subr.bf16.mxu0 0
        %465 = vmatpush1.bf16.msra.mxu0 %v381
        %466 = vmatprep.subr.bf16.mxu0 0
        %467 = vmatpush1.bf16.msra.mxu0 %v384
        %468 = vmatprep.subr.bf16.mxu0 0
        %469 = vmatpush1.bf16.msra.mxu0 0
        %470 = vmatprep.subr.bf16.mxu0 0
        %471 = vmatpush1.bf16.msra.mxu0 0
        %472 = vmatprep.subr.bf16.mxu0 0
        %473 = vmatpush1.bf16.msra.mxu0 0
        %474 = vmatprep.subr.bf16.mxu0 0
        %475 = vmatpush1.bf16.msra.mxu0 0
        %476 = vmatprep.subr.bf16.mxu0 0
        %477 = vmatpush1.bf16.msra.mxu0 0
        %478 = vmatprep.subr.bf16.mxu0 0
        %479 = vmatpush1.bf16.msra.mxu0 0
        %480 = vmatprep.subr.bf16.mxu0 0
        %481 = vmatpush1.bf16.msra.mxu0 0
        %482 = vmatprep.subr.bf16.mxu0 0
        %483 = vmatpush1.bf16.msra.mxu0 0
        %484 = vmatprep.mubr.bf16.mxu0 0
        %485 = vmatmul.mubr.bf16.gmra.mrb[0].mxu0 %v248
        %v486 = vpop.f32.mrb[0].mxu0
        %v487 = vadd.f32 0.0, %v486
        %v488 = vpop.f32.mrb[0].mxu0
        %v489 = vpop.f32.mrb[0].mxu0
        %v490 = vadd.f32 0.0, %v489
        %v491 = vpop.f32.mrb[0].mxu0
        %492 = vdwg.mxu0
        %v493 = vlaneseq
        %v494 = vshrl.u32 %v493, 7
        %v495 = vsub.s32 2, %v494
        %v496 = vrot.slane %v206, %v495
        %v497 = vadd.f32 %v444, %v496
        %v498 = vadd.f32 %v448, %v496
        %v499 = vpack.c.bf16 %v497, %v497
        %v500 = vpack.c.bf16 %v498, %v498
        %v501 = vlaneseq
        %v502 = vshrl.u32 %v501, 7
        %v503 = vsub.s32 3, %v502
        %v504 = vrot.slane %v206, %v503
        %v505 = vadd.f32 %v446, %v504
        %v506 = vadd.f32 %v450, %v504
        %v507 = vpack.c.bf16 %v505, %v505
        %v508 = vpack.c.bf16 %v506, %v506
        %v509 = vlaneseq
        %v510 = vshrl.u32 %v509, 7
        %v511 = vsub.s32 4, %v510
        %v512 = vrot.slane %v206, %v511
        %v513 = vadd.f32 %v487, %v512
        %v514 = vadd.f32 %v490, %v512
        %v515 = vpack.c.bf16 %v513, %v513
        %v516 = vpack.c.bf16 %v514, %v514
        %517 = vmatprep.subr.bf16.mxu0 0
        %518 = vmatpush1.bf16.xpose.msra.mxu0 %v507
        %519 = vmatprep.subr.bf16.mxu0 0
        %520 = vmatpush1.bf16.xpose.msra.mxu0 0
        %521 = vmatprep.subr.bf16.mxu0 0
        %522 = vmatpush1.bf16.xpose.msra.mxu0 0
        %523 = vmatprep.subr.bf16.mxu0 0
        %524 = vmatpush1.bf16.xpose.msra.mxu0 0
        %525 = vmatprep.subr.bf16.mxu0 0
        %526 = vmatpush1.bf16.xpose.msra.mxu0 0
        %527 = vmatprep.subr.bf16.mxu0 0
        %528 = vmatpush1.bf16.xpose.msra.mxu0 0
        %529 = vmatprep.subr.bf16.mxu0 0
        %530 = vmatpush1.bf16.xpose.msra.mxu0 0
        %531 = vmatprep.subr.bf16.mxu0 0
        %532 = vmatpush1.bf16.xpose.msra.mxu0 0
        %533 = vmatprep.subr.bf16.mxu0 0
        %534 = vmatpush1.bf16.xpose.msra.mxu0 0
        %535 = vmatprep.subr.bf16.mxu0 0
        %536 = vmatpush1.bf16.xpose.msra.mxu0 0
        %537 = vmatprep.subr.bf16.mxu0 0
        %538 = vmatpush1.bf16.xpose.msra.mxu0 0
        %539 = vmatprep.subr.bf16.mxu0 0
        %540 = vmatpush1.bf16.xpose.msra.mxu0 0
        %541 = vmatprep.subr.bf16.mxu0 0
        %542 = vmatpush1.bf16.xpose.msra.mxu0 0
        %543 = vmatprep.subr.bf16.mxu0 0
        %544 = vmatpush1.bf16.xpose.msra.mxu0 0
        %545 = vmatprep.subr.bf16.mxu0 0
        %546 = vmatpush1.bf16.xpose.msra.mxu0 0
        %547 = vmatprep.subr.bf16.mxu0 0
        %548 = vmatpush1.bf16.xpose.msra.mxu0 0
        %549 = vmatprep.mubr.bf16.mxu0 0
        %550 = vmatmul.mubr.bf16.gmra.mrb[0].mxu0 %v499
        %v551 = vpop.f32.mrb[0].mxu0
        %v552 = vadd.f32 0.0, %v551
        %v553 = vpop.f32.mrb[0].mxu0
        %v554 = vpop.f32.mrb[0].mxu0
        %v555 = vpop.f32.mrb[0].mxu0
        %556 = vdwg.mxu0
        %557 = vmatprep.subr.bf16.mxu0 0
        %558 = vmatpush1.bf16.xpose.msra.mxu0 %v508
        %559 = vmatprep.subr.bf16.mxu0 0
        %560 = vmatpush1.bf16.xpose.msra.mxu0 0
        %561 = vmatprep.subr.bf16.mxu0 0
        %562 = vmatpush1.bf16.xpose.msra.mxu0 0
        %563 = vmatprep.subr.bf16.mxu0 0
        %564 = vmatpush1.bf16.xpose.msra.mxu0 0
        %565 = vmatprep.subr.bf16.mxu0 0
        %566 = vmatpush1.bf16.xpose.msra.mxu0 0
        %567 = vmatprep.subr.bf16.mxu0 0
        %568 = vmatpush1.bf16.xpose.msra.mxu0 0
        %569 = vmatprep.subr.bf16.mxu0 0
        %570 = vmatpush1.bf16.xpose.msra.mxu0 0
        %571 = vmatprep.subr.bf16.mxu0 0
        %572 = vmatpush1.bf16.xpose.msra.mxu0 0
        %573 = vmatprep.subr.bf16.mxu0 0
        %574 = vmatpush1.bf16.xpose.msra.mxu0 0
        %575 = vmatprep.subr.bf16.mxu0 0
        %576 = vmatpush1.bf16.xpose.msra.mxu0 0
        %577 = vmatprep.subr.bf16.mxu0 0
        %578 = vmatpush1.bf16.xpose.msra.mxu0 0
        %579 = vmatprep.subr.bf16.mxu0 0
        %580 = vmatpush1.bf16.xpose.msra.mxu0 0
        %581 = vmatprep.subr.bf16.mxu0 0
        %582 = vmatpush1.bf16.xpose.msra.mxu0 0
        %583 = vmatprep.subr.bf16.mxu0 0
        %584 = vmatpush1.bf16.xpose.msra.mxu0 0
        %585 = vmatprep.subr.bf16.mxu0 0
        %586 = vmatpush1.bf16.xpose.msra.mxu0 0
        %587 = vmatprep.subr.bf16.mxu0 0
        %588 = vmatpush1.bf16.xpose.msra.mxu0 0
        %589 = vmatprep.mubr.bf16.mxu0 0
        %590 = vmatmul.mubr.bf16.gmra.mrb[0].mxu0 %v500
        %v591 = vpop.f32.mrb[0].mxu0
        %v592 = vadd.f32 0.0, %v591
        %v593 = vpop.f32.mrb[0].mxu0
        %v594 = vpop.f32.mrb[0].mxu0
        %v595 = vpop.f32.mrb[0].mxu0
        %596 = vdwg.mxu0
        %v597 = vlaneseq
        %v598 = vshrl.u32 %v597, 7
        %v599 = vlaneseq
        %v600 = vand.u32 %v599, 127
        %vm601 = vcmp.le.s32.totalorder %v600, %v598
        %v602 = vsel %vm601, 1, 0
        %vm603 = vcmp.eq.s32.totalorder %v602, 1
        %v604 = vsel %vm603, %v552, -1e+09
        %v605 = vsel %vm603, %v592, -1e+09
        %vm606 = vcmask 64512
        %v607 = vsel %vm606, %v604, -inf
        %608 = vmax.xlane.f32.xlu0 %v607
        %v609 = vpop.xlane.xlu0 %608
        %v610 = vsel %vm606, %v605, -inf
        %611 = vmax.xlane.f32.xlu0 %v610
        %v612 = vpop.xlane.xlu0 %611
        %v613 = vsub.f32 %v604, %v609
        %v614 = vsub.f32 %v605, %v612
        %v615 = vmul.f32 %v613, 1.442695
        %v616 = vpow.pop %v615
        %v617 = vmul.f32 %v614, 1.442695
        %v618 = vpow.pop %v617
        %v619 = vsel %vm606, %v616, 0.0
        %620 = vadd.xlane.f32.xlu0 %v619
        %v621 = vpop.xlane.xlu0 %620
        %v622 = vsel %vm606, %v618, 0.0
        %623 = vadd.xlane.f32.xlu0 %v622
        %v624 = vpop.xlane.xlu0 %623
        %v625 = vrcp.pop %v621
        %v626 = vrcp.pop %v624
        %v627 = vmul.f32 %v616, %v625
        %v628 = vmul.f32 %v618, %v626
        %v629 = vpack.c.bf16 %v627, %v627
        %v630 = vpack.c.bf16 %v628, %v628
        %v632 = vsel %vm606, %v629, 0
        %vm634 = vcmask 1043456
        %v636 = vsel %vm634, %v515, 0
        %638 = vmatprep.subr.bf16.mxu0 0
        %639 = vmatpush1.bf16.msra.mxu0 %v636
        %640 = vmatprep.subr.bf16.mxu0 0
        %641 = vmatpush1.bf16.msra.mxu0 0
        %642 = vmatprep.subr.bf16.mxu0 0
        %643 = vmatpush1.bf16.msra.mxu0 0
        %644 = vmatprep.subr.bf16.mxu0 0
        %645 = vmatpush1.bf16.msra.mxu0 0
        %646 = vmatprep.subr.bf16.mxu0 0
        %647 = vmatpush1.bf16.msra.mxu0 0
        %648 = vmatprep.subr.bf16.mxu0 0
        %649 = vmatpush1.bf16.msra.mxu0 0
        %650 = vmatprep.subr.bf16.mxu0 0
        %651 = vmatpush1.bf16.msra.mxu0 0
        %652 = vmatprep.subr.bf16.mxu0 0
        %653 = vmatpush1.bf16.msra.mxu0 0
        %654 = vmatprep.subr.bf16.mxu0 0
        %655 = vmatpush1.bf16.msra.mxu0 0
        %656 = vmatprep.subr.bf16.mxu0 0
        %657 = vmatpush1.bf16.msra.mxu0 0
        %658 = vmatprep.subr.bf16.mxu0 0
        %659 = vmatpush1.bf16.msra.mxu0 0
        %660 = vmatprep.subr.bf16.mxu0 0
        %661 = vmatpush1.bf16.msra.mxu0 0
        %662 = vmatprep.subr.bf16.mxu0 0
        %663 = vmatpush1.bf16.msra.mxu0 0
        %664 = vmatprep.subr.bf16.mxu0 0
        %665 = vmatpush1.bf16.msra.mxu0 0
        %666 = vmatprep.subr.bf16.mxu0 0
        %667 = vmatpush1.bf16.msra.mxu0 0
        %668 = vmatprep.subr.bf16.mxu0 0
        %669 = vmatpush1.bf16.msra.mxu0 0
        %670 = vmatprep.mubr.bf16.mxu0 0
        %671 = vmatmul.mubr.bf16.gmra.mrb[0].mxu0 %v632
        %v672 = vpop.f32.mrb[0].mxu0
        %v673 = vadd.f32 0.0, %v672
        %v674 = vpop.f32.mrb[0].mxu0
        %v675 = vpop.f32.mrb[0].mxu0
        %v676 = vpop.f32.mrb[0].mxu0
        %677 = vdwg.mxu0
        %v679 = vsel %vm606, %v630, 0
        %v682 = vsel %vm634, %v516, 0
        %684 = vmatprep.subr.bf16.mxu0 0
        %685 = vmatpush1.bf16.msra.mxu0 %v682
        %686 = vmatprep.subr.bf16.mxu0 0
        %687 = vmatpush1.bf16.msra.mxu0 0
        %688 = vmatprep.subr.bf16.mxu0 0
        %689 = vmatpush1.bf16.msra.mxu0 0
        %690 = vmatprep.subr.bf16.mxu0 0
        %691 = vmatpush1.bf16.msra.mxu0 0
        %692 = vmatprep.subr.bf16.mxu0 0
        %693 = vmatpush1.bf16.msra.mxu0 0
        %694 = vmatprep.subr.bf16.mxu0 0
        %695 = vmatpush1.bf16.msra.mxu0 0
        %696 = vmatprep.subr.bf16.mxu0 0
        %697 = vmatpush1.bf16.msra.mxu0 0
        %698 = vmatprep.subr.bf16.mxu0 0
        %699 = vmatpush1.bf16.msra.mxu0 0
        %700 = vmatprep.subr.bf16.mxu0 0
        %701 = vmatpush1.bf16.msra.mxu0 0
        %702 = vmatprep.subr.bf16.mxu0 0
        %703 = vmatpush1.bf16.msra.mxu0 0
        %704 = vmatprep.subr.bf16.mxu0 0
        %705 = vmatpush1.bf16.msra.mxu0 0
        %706 = vmatprep.subr.bf16.mxu0 0
        %707 = vmatpush1.bf16.msra.mxu0 0
        %708 = vmatprep.subr.bf16.mxu0 0
        %709 = vmatpush1.bf16.msra.mxu0 0
        %710 = vmatprep.subr.bf16.mxu0 0
        %711 = vmatpush1.bf16.msra.mxu0 0
        %712 = vmatprep.subr.bf16.mxu0 0
        %713 = vmatpush1.bf16.msra.mxu0 0
        %714 = vmatprep.subr.bf16.mxu0 0
        %715 = vmatpush1.bf16.msra.mxu0 0
        %716 = vmatprep.mubr.bf16.mxu0 0
        %717 = vmatmul.mubr.bf16.gmra.mrb[0].mxu0 %v679
        %v718 = vpop.f32.mrb[0].mxu0
        %v719 = vadd.f32 0.0, %v718
        %v720 = vpop.f32.mrb[0].mxu0
        %v721 = vpop.f32.mrb[0].mxu0
        %v722 = vpop.f32.mrb[0].mxu0
        %723 = vdwg.mxu0
        %v724 = vpack.c.bf16 %v719, %v673
        %v725 = vld [vmem:[%s169 + $0xc] sm:$0xf]
        %v726 = vld [vmem:[%s169 + $0x20] sm:$0xf]
        %v727 = vld [vmem:[%s169 + $0x34] sm:$0xf]
        %v728 = vld [vmem:[%s169 + $0x48] sm:$0xf]
        %v729 = vld [vmem:[%s169 + $0x5c] sm:$0xf]
        %v730 = vld [vmem:[%s169 + $0x70] sm:$0xf]
        %v731 = vld [vmem:[%s169 + $0x84] sm:$0xf]
        %v732 = vld [vmem:[%s169 + $0x98] sm:$0xf]
        %v733 = vld [vmem:[%s169 + $0xac] sm:$0xf]
        %v734 = vld [vmem:[%s169 + $0xc0] sm:$0xf]
        %v735 = vld [vmem:[%s169 + $0xd4] sm:$0xf]
        %v736 = vld [vmem:[%s169 + $0xe8] sm:$0xf]
        %v737 = vld [vmem:[%s169 + $0xfc] sm:$0xf]
        %v738 = vld [vmem:[%s169 + $0x110] sm:$0xf]
        %v739 = vld [vmem:[%s169 + $0x124] sm:$0xf]
        %v740 = vld [vmem:[%s169 + $0x138] sm:$0xf]
        %v741 = vlaneseq
        %v742 = vshrl.u32 %v741, 7
        %v743 = vsub.s32 5, %v742
        %v744 = vrot.slane %v206, %v743
        %v761 = vunpack.c.l.b16 %v725
        %v762 = vunpack.c.l.b16 %v726
        %v763 = vunpack.c.l.b16 %v727
        %v764 = vunpack.c.l.b16 %v728
        %v765 = vunpack.c.l.b16 %v729
        %v766 = vunpack.c.l.b16 %v730
        %v767 = vunpack.c.l.b16 %v731
        %v768 = vunpack.c.l.b16 %v732
        %v769 = vunpack.c.l.b16 %v733
        %v770 = vunpack.c.l.b16 %v734
        %v771 = vunpack.c.l.b16 %v735
        %v772 = vunpack.c.l.b16 %v736
        %v773 = vunpack.c.l.b16 %v737
        %v774 = vunpack.c.l.b16 %v738
        %v775 = vunpack.c.l.b16 %v739
        %v776 = vunpack.c.l.b16 %v740
        %v777 = vpack.c.b16 %v762, %v761
        %v778 = vpack.c.b16 %v764, %v763
        %v779 = vpack.c.b16 %v766, %v765
        %v780 = vpack.c.b16 %v768, %v767
        %v781 = vpack.c.b16 %v770, %v769
        %v782 = vpack.c.b16 %v772, %v771
        %v783 = vpack.c.b16 %v774, %v773
        %v784 = vpack.c.b16 %v776, %v775
        %793 = vmatprep.subr.bf16.mxu0 0
        %794 = vmatpush1.bf16.msra.mxu0 %v777
        %795 = vmatprep.subr.bf16.mxu0 0
        %796 = vmatpush1.bf16.msra.mxu0 %v778
        %797 = vmatprep.subr.bf16.mxu0 0
        %798 = vmatpush1.bf16.msra.mxu0 %v779
        %799 = vmatprep.subr.bf16.mxu0 0
        %800 = vmatpush1.bf16.msra.mxu0 %v780
        %801 = vmatprep.subr.bf16.mxu0 0
        %802 = vmatpush1.bf16.msra.mxu0 %v781
        %803 = vmatprep.subr.bf16.mxu0 0
        %804 = vmatpush1.bf16.msra.mxu0 %v782
        %805 = vmatprep.subr.bf16.mxu0 0
        %806 = vmatpush1.bf16.msra.mxu0 %v783
        %807 = vmatprep.subr.bf16.mxu0 0
        %808 = vmatpush1.bf16.msra.mxu0 %v784
        %809 = vmatprep.subr.bf16.mxu0 0
        %810 = vmatpush1.bf16.msra.mxu0 0
        %811 = vmatprep.subr.bf16.mxu0 0
        %812 = vmatpush1.bf16.msra.mxu0 0
        %813 = vmatprep.subr.bf16.mxu0 0
        %814 = vmatpush1.bf16.msra.mxu0 0
        %815 = vmatprep.subr.bf16.mxu0 0
        %816 = vmatpush1.bf16.msra.mxu0 0
        %817 = vmatprep.subr.bf16.mxu0 0
        %818 = vmatpush1.bf16.msra.mxu0 0
        %819 = vmatprep.subr.bf16.mxu0 0
        %820 = vmatpush1.bf16.msra.mxu0 0
        %821 = vmatprep.subr.bf16.mxu0 0
        %822 = vmatpush1.bf16.msra.mxu0 0
        %823 = vmatprep.subr.bf16.mxu0 0
        %824 = vmatpush1.bf16.msra.mxu0 0
        %825 = vmatprep.mubr.bf16.mxu0 0
        %826 = vmatmul.mubr.bf16.gmra.mrb[0].mxu0 %v724
        %v827 = vpop.f32.mrb[0].mxu0
        %v828 = vadd.f32 %v744, %v827
        %v829 = vpop.f32.mrb[0].mxu0
        %v830 = vpop.f32.mrb[0].mxu0
        %v831 = vadd.f32 %v744, %v830
        %v832 = vpop.f32.mrb[0].mxu0
        %833 = vdwg.mxu0
        %v834 = vadd.f32 %v208, %v828
        %v835 = vadd.f32 %v209, %v831
        %836 = vadd.xlane.f32.xlu0 %v834
        %v837 = vpop.xlane.xlu0 %836
        %838 = vadd.xlane.f32.xlu0 %v835
        %v839 = vpop.xlane.xlu0 %838
        %v840 = vmul.f32 %v837, 0.03125
        %v841 = vmul.f32 %v839, 0.03125
        %v842 = vmul.f32 %v834, %v834
        %v843 = vmul.f32 %v835, %v835
        %844 = vadd.xlane.f32.xlu0 %v842
        %v845 = vpop.xlane.xlu0 %844
        %846 = vadd.xlane.f32.xlu0 %v843
        %v847 = vpop.xlane.xlu0 %846
        %v848 = vmul.f32 %v845, 0.03125
        %v849 = vmul.f32 %v847, 0.03125
        %v850 = vmul.f32 %v840, %v840
        %v851 = vmul.f32 %v841, %v841
        %v852 = vsub.f32 %v848, %v850
        %v853 = vsub.f32 %v849, %v851
        %v854 = vsub.f32 %v834, %v840
        %v855 = vsub.f32 %v835, %v841
        %v856 = vadd.f32 %v852, 1e-05
        %v857 = vadd.f32 %v853, 1e-05
        %v858 = vrsqrt.pop %v856
        %v859 = vrsqrt.pop %v857
        %v860 = vmul.f32 %v854, %v858
        %v861 = vmul.f32 %v855, %v859
        %v862 = vlaneseq
        %v863 = vshrl.u32 %v862, 7
        %v864 = vsub.s32 6, %v863
        %v865 = vrot.slane %v206, %v864
        %v866 = vmul.f32 %v860, %v865
        %v867 = vmul.f32 %v861, %v865
        %v868 = vlaneseq
        %v869 = vshrl.u32 %v868, 7
        %v870 = vsub.s32 7, %v869
        %v871 = vrot.slane %v206, %v870
        %v872 = vadd.f32 %v866, %v871
        %v873 = vadd.f32 %v867, %v871
        %v874 = vpack.c.bf16 %v873, %v872
        %v875 = vld [vmem:[%s169 + $0x10] sm:$0xf]
        %v876 = vld [vmem:[%s169 + $0x24] sm:$0xf]
        %v877 = vld [vmem:[%s169 + $0x38] sm:$0xf]
        %v878 = vld [vmem:[%s169 + $0x4c] sm:$0xf]
        %v879 = vld [vmem:[%s169 + $0x60] sm:$0xf]
        %v880 = vld [vmem:[%s169 + $0x74] sm:$0xf]
        %v881 = vld [vmem:[%s169 + $0x88] sm:$0xf]
        %v882 = vld [vmem:[%s169 + $0x9c] sm:$0xf]
        %v883 = vld [vmem:[%s169 + $0xb0] sm:$0xf]
        %v884 = vld [vmem:[%s169 + $0xc4] sm:$0xf]
        %v885 = vld [vmem:[%s169 + $0xd8] sm:$0xf]
        %v886 = vld [vmem:[%s169 + $0xec] sm:$0xf]
        %v887 = vld [vmem:[%s169 + $0x100] sm:$0xf]
        %v888 = vld [vmem:[%s169 + $0x114] sm:$0xf]
        %v889 = vld [vmem:[%s169 + $0x128] sm:$0xf]
        %v890 = vld [vmem:[%s169 + $0x13c] sm:$0xf]
        %v907 = vunpack.c.l.b16 %v875
        %v908 = vunpack.c.l.b16 %v876
        %v909 = vunpack.c.l.b16 %v877
        %v910 = vunpack.c.l.b16 %v878
        %v911 = vunpack.c.l.b16 %v879
        %v912 = vunpack.c.l.b16 %v880
        %v913 = vunpack.c.l.b16 %v881
        %v914 = vunpack.c.l.b16 %v882
        %v915 = vunpack.c.l.b16 %v883
        %v916 = vunpack.c.l.b16 %v884
        %v917 = vunpack.c.l.b16 %v885
        %v918 = vunpack.c.l.b16 %v886
        %v919 = vunpack.c.l.b16 %v887
        %v920 = vunpack.c.l.b16 %v888
        %v921 = vunpack.c.l.b16 %v889
        %v922 = vunpack.c.l.b16 %v890
        %v923 = vpack.c.b16 %v908, %v907
        %v924 = vpack.c.b16 %v910, %v909
        %v925 = vpack.c.b16 %v912, %v911
        %v926 = vpack.c.b16 %v914, %v913
        %v927 = vpack.c.b16 %v916, %v915
        %v928 = vpack.c.b16 %v918, %v917
        %v929 = vpack.c.b16 %v920, %v919
        %v930 = vpack.c.b16 %v922, %v921
        %939 = vmatprep.subr.bf16.mxu0 0
        %940 = vmatpush1.bf16.msra.mxu0 %v923
        %941 = vmatprep.subr.bf16.mxu0 0
        %942 = vmatpush1.bf16.msra.mxu0 %v924
        %943 = vmatprep.subr.bf16.mxu0 0
        %944 = vmatpush1.bf16.msra.mxu0 %v925
        %945 = vmatprep.subr.bf16.mxu0 0
        %946 = vmatpush1.bf16.msra.mxu0 %v926
        %947 = vmatprep.subr.bf16.mxu0 0
        %948 = vmatpush1.bf16.msra.mxu0 %v927
        %949 = vmatprep.subr.bf16.mxu0 0
        %950 = vmatpush1.bf16.msra.mxu0 %v928
        %951 = vmatprep.subr.bf16.mxu0 0
        %952 = vmatpush1.bf16.msra.mxu0 %v929
        %953 = vmatprep.subr.bf16.mxu0 0
        %954 = vmatpush1.bf16.msra.mxu0 %v930
        %955 = vmatprep.subr.bf16.mxu0 0
        %956 = vmatpush1.bf16.msra.mxu0 0
        %957 = vmatprep.subr.bf16.mxu0 0
        %958 = vmatpush1.bf16.msra.mxu0 0
        %959 = vmatprep.subr.bf16.mxu0 0
        %960 = vmatpush1.bf16.msra.mxu0 0
        %961 = vmatprep.subr.bf16.mxu0 0
        %962 = vmatpush1.bf16.msra.mxu0 0
        %963 = vmatprep.subr.bf16.mxu0 0
        %964 = vmatpush1.bf16.msra.mxu0 0
        %965 = vmatprep.subr.bf16.mxu0 0
        %966 = vmatpush1.bf16.msra.mxu0 0
        %967 = vmatprep.subr.bf16.mxu0 0
        %968 = vmatpush1.bf16.msra.mxu0 0
        %969 = vmatprep.subr.bf16.mxu0 0
        %970 = vmatpush1.bf16.msra.mxu0 0
        %971 = vmatprep.mubr.bf16.mxu0 0
        %972 = vmatmul.mubr.bf16.gmra.mrb[0].mxu0 %v874
        %v973 = vpop.f32.mrb[0].mxu0
        %v974 = vadd.f32 0.0, %v973
        %v975 = vpop.f32.mrb[0].mxu0
        %v976 = vpop.f32.mrb[0].mxu0
        %v977 = vadd.f32 0.0, %v976
        %v978 = vpop.f32.mrb[0].mxu0
        %979 = vdwg.mxu0
        %v980 = vadd.f32 %v834, %v974
        %v981 = vadd.f32 %v835, %v977
        %v982 = vlaneseq
        %v983 = vshrl.u32 %v982, 7
        %v984 = vsub.s32 0, %v983
        %v985 = vrot.slane %v207, %v984
        %v986 = vadd.f32 %v980, %v985
        %v987 = vadd.f32 %v981, %v985
        %988 = vst [vmem:[#allocation5] sm:$0xff] %v986
        %989 = vst [vmem:[#allocation5 + $0x8] sm:$0xff] %v987
        // Predicated region
        $region41: #{tpu_custom_call.1} parent=31 // pred_check
          %p990 = pneg %p104
        $region42: #{tpu_custom_call.1} parent=31 // pred_check_branch
          %992 = sbr.rel (%p990) target = $region44
        $region43: #{tpu_custom_call.1} parent=31 // pred_region
          %s994 = ssub.s32 256, 256
          %995 = vsyncadd [#allocation4], %s994
          %s996 = sshll.u32 [#allocation5], 4
          %s997 = int_to_ptr.vmem [resolvable:$true] %s996
          %1002 = dma.vmem_to_hbm [thread:$0]  %s997, 256, %s3, [#allocation4], 128, 128, 8
        $region44: #{tpu_custom_call.1} parent=31 // pred_fallthru
          _
        // Predicated region
        $region45: #{tpu_custom_call.1} parent=31 // pred_check
          %p1003 = pneg %p104
        $region46: #{tpu_custom_call.1} parent=31 // pred_check_branch
          %1005 = sbr.rel (%p1003) target = $region48
        $region47: #{tpu_custom_call.1} parent=31 // pred_region
          %1006 = dma.done [#allocation4], 256
        $region48: #{tpu_custom_call.1} parent=31 // pred_fallthru
          _
      $region32: #{tpu_custom_call.1} parent=5 // pred_fallthru
        _
      %p1007 = scmp.le.s32.totalorder 2, %s13
      // Predicated region
      $region49: #{tpu_custom_call.1} parent=5 // pred_check
        %p1008 = pneg %p1007
      $region50: #{tpu_custom_call.1} parent=5 // pred_check_branch
        %1010 = sbr.rel (%p1008) target = $region52
      $region51: #{tpu_custom_call.1} parent=5 // pred_region
        %s1011 = ssub.s32 %s13, 2
      $region52: #{tpu_custom_call.1} parent=5 // pred_fallthru
        _
    $region6: #{tpu_custom_call.1} parent=1 // loop_footer
      %s17 = sadd.s32 1, %s13
    $region7: #{tpu_custom_call.1} parent=1 // loop_footer_branch
      %12 = sbr.rel target = $region3
    $region8: #{tpu_custom_call.1} parent=1 // loop_exit
      _
    %1012 = vsyncpa [#allocation3], 1
    %s1013 = scalar_lea.sflag [#allocation3], 1
    %1014 = vsyncpa %s1013, 1
    %1015 = vsyncpa [#allocation4], 1
    %s1016 = scalar_lea.sflag [#allocation4], 1
    %1017 = vsyncpa %s1016, 1

</llo_original>
